<compile_context>
chip_gen: v7x
topology: tpu7x:2x2x1
jax: 0.10.0
libtpu: 0.0.40
codegen_flags: <defaults>
</compile_context>

<pallas_src>
import jax
import jax.numpy as jnp
from jax.experimental import pallas as pl
from jax.experimental.pallas import tpu as pltpu


# ----------------------------------------------------------------------------
# helpers
# ----------------------------------------------------------------------------
def _round_up(x, m):
    return (x + m - 1) // m * m


def _pick_lane_tile(dim, cap):
    """Lane-dim (last-axis) tile: multiple of 128, aligned to 256 (full MXU
    edge on v6e/v7x) whenever possible, never larger than the cap."""
    tile = min(cap, _round_up(dim, 128))
    if tile >= 256:
        tile = (tile // 256) * 256
    return tile


def _pick_row_tile(m, cap):
    """Sublane-dim tile: bf16 packs 2 rows per sublane -> multiple of 16."""
    return min(_round_up(cap, 16), _round_up(m, 16))


# ----------------------------------------------------------------------------
# Fused kernel:  y[i, j] = silu(x[i] @ W1 + b1) @ W2[:, j] + b2[j]
# ----------------------------------------------------------------------------
def _fused_mlp_kernel(x_ref, w1_ref, b1_ref, w2_ref, b2_ref, o_ref,
                      h_ref, acc_ref):
    j = pl.program_id(1)          # output (N) tile
    l = pl.program_id(2)          # hidden (H) tile / fc2 reduction step

    @pl.when(l == 0)
    def _init():
        acc_ref[...] = jnp.zeros_like(acc_ref)

    # fc1 + SiLU for hidden slice l.  Computed only on the first N tile of each
    # M tile; later N tiles reuse the bf16 hidden slab cached in VMEM scratch.
    @pl.when(j == 0)
    def _fc1():
        h = jnp.dot(x_ref[...], w1_ref[...], preferred_element_type=jnp.float32)
        h = h + b1_ref[...]                    # (tm, th) + (1, th) broadcast, f32
        h = h * jax.nn.sigmoid(h)              # SiLU (EUP transcendental)
        h_ref[l] = h.astype(h_ref.dtype)       # bf16: fc2's MXU is the only consumer

    # fc2 partial product for this hidden slice.
    acc_ref[...] += jnp.dot(h_ref[l], w2_ref[...],
                            preferred_element_type=jnp.float32)

    @pl.when(l == pl.num_programs(2) - 1)
    def _epilogue():
        o_ref[...] = (acc_ref[...] + b2_ref[...]).astype(o_ref.dtype)


def _fused_mlp_call(x_padded, params, tm):
    Kp, Hp, Np = params["Kp"], params["Hp"], params["Np"]
    th, tn = params["th"], params["tn"]
    Mp = x_padded.shape[0]
    n_h = Hp // th
    grid = (Mp // tm, Np // tn, n_h)

    # VMEM budget (double-buffered inputs/outputs + scratch), with headroom,
    # kept under v7x's 64 MiB physical VMEM.
    vmem_bytes = (
        2 * tm * Kp * 2          # x tile, bf16
        + 2 * Kp * th * 2        # w1 tile, bf16
        + 2 * 8 * th * 4         # b1 tile, f32 (sublane-padded)
        + 2 * th * tn * 2        # w2 tile, bf16
        + 2 * 8 * tn * 4         # b2 tile, f32
        + 2 * tm * tn * 4        # out tile, f32
        + n_h * tm * th * 2      # hidden scratch, bf16
        + tm * tn * 4            # accumulator, f32
    )
    vmem_limit = int(min(max(vmem_bytes * 1.5, 32 * 1024 * 1024),
                         56 * 1024 * 1024))

    cost = pl.CostEstimate(
        flops=2 * Mp * Hp * Kp + 2 * Mp * Np * Hp,
        transcendentals=Mp * Hp,
        bytes_accessed=(Mp * Kp * 2 + Kp * Hp * 2 + Hp * Np * 2
                        + Hp * 4 + Np * 4 + Mp * Np * 4),
    )

    return pl.pallas_call(
        _fused_mlp_kernel,
        out_shape=jax.ShapeDtypeStruct((Mp, Np), jnp.float32),
        grid=grid,
        in_specs=[
            # x: full-K row block, re-fetched only when the M tile changes.
            pl.BlockSpec((tm, Kp), lambda i, j, l: (i, 0)),
            # w1 / b1: only needed when j == 0 -> pin index to block 0 for j > 0
            # so W1 is not re-streamed from HBM while reusing the hidden cache.
            pl.BlockSpec((Kp, th), lambda i, j, l: (0, jnp.where(j == 0, l, 0))),
            pl.BlockSpec((1, th), lambda i, j, l: (0, jnp.where(j == 0, l, 0))),
            pl.BlockSpec((th, tn), lambda i, j, l: (l, j)),
            pl.BlockSpec((1, tn), lambda i, j, l: (0, j)),
        ],
        out_specs=pl.BlockSpec((tm, tn), lambda i, j, l: (i, j)),
        scratch_shapes=[
            pltpu.VMEM((n_h, tm, th), jnp.bfloat16),   # cached hidden activation
            pltpu.VMEM((tm, tn), jnp.float32),         # fc2 accumulator
        ],
        compiler_params=pltpu.CompilerParams(
            # Only the M axis may split across v7x's 2 TensorCores: the hidden
            # scratch is carried across the N axis; H is a reduction.
            dimension_semantics=("parallel", "arbitrary", "arbitrary"),
            vmem_limit_bytes=vmem_limit,
        ),
        cost_estimate=cost,
    )(x_padded, params["w1"], params["b1"], params["w2"], params["b2"])


# ----------------------------------------------------------------------------
# Module-level API (matches the PyTorch Mlp: fc1 -> SiLU -> drop -> fc2 -> drop)
# ----------------------------------------------------------------------------
def init_mlp(key, in_features, hidden_features=None, out_features=None,
             *, tn_cap=1024, th_cap=512):
    out_features = out_features or in_features
    hidden_features = hidden_features or in_features
    k1, k2, k3, k4 = jax.random.split(key, 4)

    # f32 master weights (kept only for the pure-JAX reference check).
    w1 = 0.02 * jax.random.normal(k1, (in_features, hidden_features), jnp.float32)
    b1 = 0.02 * jax.random.normal(k2, (hidden_features,), jnp.float32)
    w2 = 0.02 * jax.random.normal(k3, (hidden_features, out_features), jnp.float32)
    b2 = 0.02 * jax.random.normal(k4, (out_features,), jnp.float32)

    # One-time tile selection + padding + bf16 cast (no per-call weight traffic).
    th = _pick_lane_tile(hidden_features, th_cap)
    tn = _pick_lane_tile(out_features, tn_cap)
    Kp = _round_up(in_features, 128)
    Hp = _round_up(hidden_features, th)
    Np = _round_up(out_features, tn)

    w1_p = jnp.pad(w1, ((0, Kp - in_features), (0, Hp - hidden_features))
                   ).astype(jnp.bfloat16)
    w2_p = jnp.pad(w2, ((0, Hp - hidden_features), (0, Np - out_features))
                   ).astype(jnp.bfloat16)
    b1_p = jnp.pad(b1.reshape(1, -1), ((0, 0), (0, Hp - hidden_features)))
    b2_p = jnp.pad(b2.reshape(1, -1), ((0, 0), (0, Np - out_features)))

    return dict(
        w1=w1_p, b1=b1_p, w2=w2_p, b2=b2_p,
        in_features=in_features, hidden_features=hidden_features,
        out_features=out_features,
        Kp=Kp, Hp=Hp, Np=Np, th=th, tn=tn,
        ref=dict(w1=w1, b1=b1, w2=w2, b2=b2),
    )


def mlp_forward(x, params, *, tm_cap=512):
    """y = fc2(drop(silu(fc1(x))));  drop(p=0.0) / eval mode is the identity."""
    *lead, C = x.shape
    assert C == params["in_features"], (C, params["in_features"])
    Kp, Np = params["Kp"], params["Np"]
    out_f = params["out_features"]

    x2 = x.reshape(-1, C).astype(jnp.bfloat16)
    M = x2.shape[0]
    tm = _pick_row_tile(M, tm_cap)
    Mp = _round_up(M, tm)
    if (Mp, Kp) != (M, C):
        x2 = jnp.pad(x2, ((0, Mp - M), (0, Kp - C)))

    out = _fused_mlp_call(x2, params, tm)

    if (Mp, Np) != (M, out_f):
        out = out[:M, :out_f]
    return out.reshape(*lead, out_f)


def mlp_reference(x, params):
    """Pure-JAX f32 reference for correctness checking."""
    r = params["ref"]
    h = x @ r["w1"] + r["b1"]
    h = h * jax.nn.sigmoid(h)
    return h @ r["w2"] + r["b2"]


# ----------------------------------------------------------------------------
if __name__ == "__main__":
    key = jax.random.PRNGKey(0)
    k_params, k_x = jax.random.split(key)

    # Small shapes; tile caps chosen so EVERY grid axis has >= 2 blocks, which
    # exercises the j==0 hidden-cache reuse, the hidden-dim accumulation, and
    # the M-padding path (M = 120 -> padded to 128).
    B, L = 2, 60
    IN_F, HID_F, OUT_F = 128, 512, 256

    params = init_mlp(k_params, IN_F, HID_F, OUT_F, tn_cap=128, th_cap=256)
    x = jax.random.normal(k_x, (B, L, IN_F), jnp.float32)

    out = jax.block_until_ready(mlp_forward(x, params, tm_cap=64))

    assert out.shape == (B, L, OUT_F), out.shape
    assert bool(jnp.all(jnp.isfinite(out)))

    ref = mlp_reference(x, params)
    max_err = float(jnp.max(jnp.abs(out - ref)))
    # bf16 MXU operands vs f32 reference -> inference-level tolerance.
    assert bool(jnp.allclose(out, ref, atol=5e-2, rtol=5e-2)), max_err

    print("KERNEL_OK")
</pallas_src>

<mosaic_0001>
module attributes {stable_mosaic.version = 11 : i64} {
  func.func @_fused_mlp_kernel(%arg0: i32, %arg1: i32, %arg2: i32, %arg3: memref<64x128xbf16, #tpu.memory_space<vmem>>, %arg4: memref<128x256xbf16, #tpu.memory_space<vmem>>, %arg5: memref<1x256xf32, #tpu.memory_space<vmem>>, %arg6: memref<256x128xbf16, #tpu.memory_space<vmem>>, %arg7: memref<1x128xf32, #tpu.memory_space<vmem>>, %arg8: memref<64x128xf32, #tpu.memory_space<vmem>>, %arg9: memref<2x64x256xbf16, #tpu.memory_space<vmem>>, %arg10: memref<64x128xf32, #tpu.memory_space<vmem>>) attributes {dimension_semantics = [#tpu.dimension_semantics<parallel>, #tpu.dimension_semantics<arbitrary>, #tpu.dimension_semantics<arbitrary>], iteration_bounds = array<i64: 2, 2, 2>, scalar_prefetch = 0 : i64, scratch_operands = 2 : i64, tpu.core_type = #tpu.core_type<tc>, window_params = [{transform_indices = @transform_0, window_bounds = array<i64: 64, 128>}, {transform_indices = @transform_1, window_bounds = array<i64: 128, 256>}, {transform_indices = @transform_2, window_bounds = array<i64: 1, 256>}, {transform_indices = @transform_3, window_bounds = array<i64: 256, 128>}, {transform_indices = @transform_4, window_bounds = array<i64: 1, 128>}, {transform_indices = @transform_5, window_bounds = array<i64: 64, 128>}]} {
    %c0_i32 = arith.constant 0 : i32
    %0 = arith.cmpi eq, %arg2, %c0_i32 : i32
    %1 = arith.extui %0 : i1 to i32
    %c0_i32_0 = arith.constant 0 : i32
    %2 = arith.cmpi ne, %1, %c0_i32_0 : i32
    scf.if %2 {
      %cst_11 = arith.constant 0.000000e+00 : f32
      %17 = vector.broadcast %cst_11 : f32 to vector<64x128xf32>
      %c0_12 = arith.constant 0 : index
      %c0_13 = arith.constant 0 : index
      %18 = vector.load %arg10[%c0_12, %c0_13] : memref<64x128xf32, #tpu.memory_space<vmem>>, vector<64x128xf32>
      tpu.vector_store %arg10[%c0_12, %c0_13], %17 {strides = array<i32>} : memref<64x128xf32, #tpu.memory_space<vmem>>, vector<64x128xf32>,
    } else {
    }
    %c0_i32_1 = arith.constant 0 : i32
    %3 = arith.cmpi eq, %arg1, %c0_i32_1 : i32
    %4 = arith.extui %3 : i1 to i32
    %c0_i32_2 = arith.constant 0 : i32
    %5 = arith.cmpi ne, %4, %c0_i32_2 : i32
    scf.if %5 {
      %c0_11 = arith.constant 0 : index
      %c0_12 = arith.constant 0 : index
      %17 = vector.load %arg3[%c0_11, %c0_12] : memref<64x128xbf16, #tpu.memory_space<vmem>>, vector<64x128xbf16>
      %c0_13 = arith.constant 0 : index
      %c0_14 = arith.constant 0 : index
      %18 = vector.load %arg4[%c0_13, %c0_14] : memref<128x256xbf16, #tpu.memory_space<vmem>>, vector<128x256xbf16>
      %cst_15 = arith.constant dense<0.000000e+00> : vector<64x256xf32>
      %19 = tpu.matmul %17, %18, %cst_15 {dimension_numbers = #tpu.dot_dimension_numbers<[1], [0], [0], [1], [0, 0, 1, 1], [], []>} : vector<64x128xbf16>, vector<128x256xbf16>, vector<64x256xf32> -> vector<64x256xf32>
      %c0_16 = arith.constant 0 : index
      %c0_17 = arith.constant 0 : index
      %20 = vector.load %arg5[%c0_16, %c0_17] : memref<1x256xf32, #tpu.memory_space<vmem>>, vector<1x256xf32>
      %21 = vector.broadcast %20 : vector<1x256xf32> to vector<64x256xf32>
      %22 = arith.addf %19, %21 : vector<64x256xf32>
      %23 = arith.negf %22 : vector<64x256xf32>
      %24 = math.exp %23 : vector<64x256xf32>
      %cst_18 = arith.constant 1.000000e+00 : f32
      %25 = vector.broadcast %cst_18 : f32 to vector<64x256xf32>
      %26 = arith.addf %25, %24 : vector<64x256xf32>
      %27 = arith.divf %25, %26 : vector<64x256xf32>
      %28 = arith.mulf %22, %27 : vector<64x256xf32>
      %29 = arith.truncf %28 : vector<64x256xf32> to vector<64x256xbf16>
      %30 = arith.index_cast %arg2 : i32 to index
      %c0_19 = arith.constant 0 : index
      %c0_20 = arith.constant 0 : index
      %31 = vector.load %arg9[%30, %c0_19, %c0_20] : memref<2x64x256xbf16, #tpu.memory_space<vmem>>, vector<1x64x256xbf16>
      %32 = vector.shape_cast %31 : vector<1x64x256xbf16> to vector<64x256xbf16>
      %33 = vector.shape_cast %29 : vector<64x256xbf16> to vector<1x64x256xbf16>
      tpu.vector_store %arg9[%30, %c0_19, %c0_20], %33 {strides = array<i32>} : memref<2x64x256xbf16, #tpu.memory_space<vmem>>, vector<1x64x256xbf16>,
    } else {
    }
    %c0 = arith.constant 0 : index
    %c0_3 = arith.constant 0 : index
    %6 = vector.load %arg10[%c0, %c0_3] : memref<64x128xf32, #tpu.memory_space<vmem>>, vector<64x128xf32>
    %7 = arith.index_cast %arg2 : i32 to index
    %c0_4 = arith.constant 0 : index
    %c0_5 = arith.constant 0 : index
    %8 = vector.load %arg9[%7, %c0_4, %c0_5] : memref<2x64x256xbf16, #tpu.memory_space<vmem>>, vector<1x64x256xbf16>
    %9 = vector.shape_cast %8 : vector<1x64x256xbf16> to vector<64x256xbf16>
    %c0_6 = arith.constant 0 : index
    %c0_7 = arith.constant 0 : index
    %10 = vector.load %arg6[%c0_6, %c0_7] : memref<256x128xbf16, #tpu.memory_space<vmem>>, vector<256x128xbf16>
    %cst = arith.constant dense<0.000000e+00> : vector<64x128xf32>
    %11 = tpu.matmul %9, %10, %cst {dimension_numbers = #tpu.dot_dimension_numbers<[1], [0], [0], [1], [0, 0, 1, 1], [], []>} : vector<64x256xbf16>, vector<256x128xbf16>, vector<64x128xf32> -> vector<64x128xf32>
    %12 = arith.addf %6, %11 : vector<64x128xf32>
    %c0_8 = arith.constant 0 : index
    %c0_9 = arith.constant 0 : index
    %13 = vector.load %arg10[%c0_8, %c0_9] : memref<64x128xf32, #tpu.memory_space<vmem>>, vector<64x128xf32>
    tpu.vector_store %arg10[%c0_8, %c0_9], %12 {strides = array<i32>} : memref<64x128xf32, #tpu.memory_space<vmem>>, vector<64x128xf32>,
    %c1_i32 = arith.constant 1 : i32
    %14 = arith.cmpi eq, %arg2, %c1_i32 : i32
    %15 = arith.extui %14 : i1 to i32
    %c0_i32_10 = arith.constant 0 : i32
    %16 = arith.cmpi ne, %15, %c0_i32_10 : i32
    scf.if %16 {
      %c0_11 = arith.constant 0 : index
      %c0_12 = arith.constant 0 : index
      %17 = vector.load %arg10[%c0_11, %c0_12] : memref<64x128xf32, #tpu.memory_space<vmem>>, vector<64x128xf32>
      %c0_13 = arith.constant 0 : index
      %c0_14 = arith.constant 0 : index
      %18 = vector.load %arg7[%c0_13, %c0_14] : memref<1x128xf32, #tpu.memory_space<vmem>>, vector<1x128xf32>
      %19 = vector.broadcast %18 : vector<1x128xf32> to vector<64x128xf32>
      %20 = arith.addf %17, %19 : vector<64x128xf32>
      %c0_15 = arith.constant 0 : index
      %c0_16 = arith.constant 0 : index
      %21 = vector.load %arg8[%c0_15, %c0_16] : memref<64x128xf32, #tpu.memory_space<vmem>>, vector<64x128xf32>
      tpu.vector_store %arg8[%c0_15, %c0_16], %20 {strides = array<i32>} : memref<64x128xf32, #tpu.memory_space<vmem>>, vector<64x128xf32>,
    } else {
    }
    return
  }
  func.func @transform_0(%arg0: i32, %arg1: i32, %arg2: i32) -> (i32, i32) {
    %c0_i32 = arith.constant 0 : i32
    %c0_i32_0 = arith.constant 0 : i32
    return %arg0, %c0_i32 : i32, i32
  }
  func.func @transform_1(%arg0: i32, %arg1: i32, %arg2: i32) -> (i32, i32) {
    %c0_i32 = arith.constant 0 : i32
    %0 = arith.cmpi eq, %arg1, %c0_i32 : i32
    %c0_i32_0 = arith.constant 0 : i32
    %1 = arith.select %0, %arg2, %c0_i32_0 : i32
    %c0_i32_1 = arith.constant 0 : i32
    %c0_i32_2 = arith.constant 0 : i32
    return %c0_i32_1, %1 : i32, i32
  }
  func.func @transform_2(%arg0: i32, %arg1: i32, %arg2: i32) -> (i32, i32) {
    %c0_i32 = arith.constant 0 : i32
    %0 = arith.cmpi eq, %arg1, %c0_i32 : i32
    %c0_i32_0 = arith.constant 0 : i32
    %1 = arith.select %0, %arg2, %c0_i32_0 : i32
    %c0_i32_1 = arith.constant 0 : i32
    %c0_i32_2 = arith.constant 0 : i32
    return %c0_i32_1, %1 : i32, i32
  }
  func.func @transform_3(%arg0: i32, %arg1: i32, %arg2: i32) -> (i32, i32) {
    %c0_i32 = arith.constant 0 : i32
    return %arg2, %arg1 : i32, i32
  }
  func.func @transform_4(%arg0: i32, %arg1: i32, %arg2: i32) -> (i32, i32) {
    %c0_i32 = arith.constant 0 : i32
    %c0_i32_0 = arith.constant 0 : i32
    return %c0_i32, %arg1 : i32, i32
  }
  func.func @transform_5(%arg0: i32, %arg1: i32, %arg2: i32) -> (i32, i32) {
    %c0_i32 = arith.constant 0 : i32
    return %arg0, %arg1 : i32, i32
  }
}

</mosaic_0001>

<llo_original>
// kernel: tpu_custom_call.1
$region0: #{tpu_custom_call.1}
  #allocation0 [shape = 'u32[]', space=smem, size = 0x4, offset = 0x4, fixed_abs, tag = 'smem constant byte address 0x4 - core index']
  #allocation1 [shape = 'u32[144,128]{1,0:T(1,128)}', space=vmem, size = 0x12000, scoped, tag = 'internal scratch']
  #allocation2 [shape = 'bf16[2,64,256]{2,1,0:T(16,128)(2,1)}', space=vmem, size = 0x10000, scoped, tag = 'scratch operand']
  #allocation3 [shape = 'f32[64,128]{1,0:T(8,128)}', space=vmem, size = 0x8000, scoped, tag = 'scratch operand']
  %s0 = inlined_call_operand.hbm [shape: bf16[128,128], index: 0, kind: input, shape index: {}]
  %s1 = inlined_call_operand.hbm [shape: bf16[128,512], index: 1, kind: input, shape index: {}]
  %s2 = inlined_call_operand.vmem [shape: f32[1,512], index: 2, kind: input, shape index: {}]
  %s3 = inlined_call_operand.hbm [shape: bf16[512,256], index: 3, kind: input, shape index: {}]
  %s4 = inlined_call_operand.vmem [shape: f32[1,256], index: 4, kind: input, shape index: {}]
  %s5 = inlined_call_operand.hbm [shape: f32[128,256], index: 5, kind: output, shape index: {}]
  %s6 = sld [smem:[#allocation0]]
  $region77: #{tpu_custom_call.1} parent=0
    _
  %s8 = ssub.s32 1, %s6
  %s9 = scalar_select 0, %s8, %s6
  $region1: #{tpu_custom_call.1} parent=0
    #allocation4 [shape = 'u8[32768]{0}', space=vmem, size = 0x8000, scoped, tag = 'input window, operand 0']
    #allocation5 [shape = 's32[2]{0}', space=sflag, size = 0x8, scoped, tag = 'scoped memory for tpu_custom_call.1']
    #allocation6 [shape = 's32[2]{0}', space=sflag, size = 0x8, scoped, tag = 'scoped memory for tpu_custom_call.1']
    #allocation7 [shape = 'u8[131072]{0}', space=vmem, size = 0x20000, scoped, tag = 'input window, operand 1']
    #allocation8 [shape = 's32[2]{0}', space=sflag, size = 0x8, scoped, tag = 'scoped memory for tpu_custom_call.1']
    #allocation9 [shape = 'u8[131072]{0}', space=vmem, size = 0x20000, scoped, tag = 'input window, operand 3']
    #allocation10 [shape = 'u8[65536]{0}', space=vmem, size = 0x10000, scoped, tag = 'output window, operand 0']
    %10 = vsyncpa [#allocation5], 0
    %s11 = scalar_lea.sflag [#allocation5], 1
    %12 = vsyncpa %s11, 0
    %13 = vsyncpa [#allocation8], 0
    %s14 = scalar_lea.sflag [#allocation8], 1
    %15 = vsyncpa %s14, 0
    %16 = vsyncpa [#allocation6], 0
    %s17 = scalar_lea.sflag [#allocation6], 1
    %18 = vsyncpa %s17, 0
    loop: start=0, step=1, limit=10
    $region2: #{tpu_custom_call.1} parent=1 // loop_pre_header
      _
    $region3: #{tpu_custom_call.1} parent=1 // loop_header
      %s20 = sphi 0, %s24
      %p21 = scmp.ge.s32.totalorder %s20, 10
      %s27 = sphi 0, %s46
      %s28 = sphi 0, %s42
      %s29 = sphi 0, %s38
      %s30 = sphi 0, %s27
      %s31 = sphi 0, %s28
      %s32 = sphi 0, %s29
      %s33 = sphi 0, %s30
      %s34 = sphi 0, %s31
      %s35 = sphi 0, %s32
      %s49 = sphi 0, %s51
      %s52 = sphi 0, %s49
      %s53 = sphi 0, %s52
      %s69 = sphi 0, %s53
      %s79 = sphi 0, %s81
      %s82 = sphi 0, %s79
      %s83 = sphi 0, %s82
      %s99 = sphi 0, %s83
      %s109 = sphi 0, %s111
      %s112 = sphi 0, %s109
      %s113 = sphi 0, %s112
      %s129 = sphi 0, %s113
      %s137 = sphi 0, %s139
      %s140 = sphi 0, %s137
      %s141 = sphi 0, %s140
      %s157 = sphi 0, %s141
      %s163 = sphi 0, %s165
      %s166 = sphi 0, %s163
      %s167 = sphi 0, %s166
      %s183 = sphi 0, %s167
      %s191 = sphi 0, %s193
      %s194 = sphi 0, %s191
      %s195 = sphi 0, %s194
      %s211 = sphi 0, %s195
    $region4: #{tpu_custom_call.1} parent=1 // loop_header_branch
      %23 = sbr.rel (%p21) target = $region8
    $region5: #{tpu_custom_call.1} parent=1 // loop_body
      %s25 = ssub.s32 %s20, 1
      %s26 = ssub.s32 %s20, 2
      %s36 = sadd.s32 1, %s29
      %p37 = scmp.ge.s32.totalorder %s36, 2
      %s38 = scalar_select %p37, 0, %s36
      %s39 = sadd.s32 1, %s28
      %s40 = scalar_select %p37, %s39, %s28
      %p41 = scmp.ge.s32.totalorder %s40, 2
      %s42 = scalar_select %p41, 0, %s40
      %s43 = sadd.s32 1, %s27
      %s44 = scalar_select %p41, %s43, %s27
      %p45 = scmp.ge.s32.totalorder %s44, 2
      %s46 = scalar_select %p45, 0, %s44
      %s47 = ssub.s32 %s27, %s46
      %p48 = scmp.eq.s32.totalorder %s47, 0
      %s50 = sadd.s32 %s49, 1
      %s51 = scalar_select %p48, %s49, %s50
      %p54 = pneg %p48
      %p55 = scmp.eq.s32.totalorder %s20, 7
      %p56 = por %p54, %p55
      %p57 = scmp.ne.s32.totalorder %s49, %s52
      %p58 = scmp.eq.s32.totalorder %s20, 0
      %p59 = por %p57, %p58
      %p60 = scmp.ne.s32.totalorder %s49, %s52
      %p61 = scmp.eq.s32.totalorder %s25, 7
      %p62 = por %p60, %p61
      %p63 = scmp.ne.s32.totalorder %s52, %s53
      %p64 = scmp.eq.s32.totalorder %s25, 0
      %p65 = por %p63, %p64
      %p66 = scmp.ne.s32.totalorder %s52, %s53
      %p67 = scmp.eq.s32.totalorder %s26, 7
      %p68 = por %p66, %p67
      %p70 = scmp.ne.s32.totalorder %s53, %s69
      %p71 = scmp.eq.s32.totalorder %s26, 0
      %p72 = por %p70, %p71
      %p73 = scmp.eq.s32.totalorder %s28, 0
      %s74 = scalar_select %p73, %s29, 0
      %p75 = scmp.eq.s32.totalorder %s42, 0
      %s76 = scalar_select %p75, %s38, 0
      %s77 = ssub.s32 %s74, %s76
      %p78 = scmp.eq.s32.totalorder %s77, 0
      %s80 = sadd.s32 %s79, 1
      %s81 = scalar_select %p78, %s79, %s80
      %p84 = pneg %p78
      %p85 = scmp.eq.s32.totalorder %s20, 7
      %p86 = por %p84, %p85
      %p87 = scmp.ne.s32.totalorder %s79, %s82
      %p88 = scmp.eq.s32.totalorder %s20, 0
      %p89 = por %p87, %p88
      %p90 = scmp.ne.s32.totalorder %s79, %s82
      %p91 = scmp.eq.s32.totalorder %s25, 7
      %p92 = por %p90, %p91
      %p93 = scmp.ne.s32.totalorder %s82, %s83
      %p94 = scmp.eq.s32.totalorder %s25, 0
      %p95 = por %p93, %p94
      %p96 = scmp.ne.s32.totalorder %s82, %s83
      %p97 = scmp.eq.s32.totalorder %s26, 7
      %p98 = por %p96, %p97
      %p100 = scmp.ne.s32.totalorder %s83, %s99
      %p101 = scmp.eq.s32.totalorder %s26, 0
      %p102 = por %p100, %p101
      %p103 = scmp.eq.s32.totalorder %s28, 0
      %s104 = scalar_select %p103, %s29, 0
      %p105 = scmp.eq.s32.totalorder %s42, 0
      %s106 = scalar_select %p105, %s38, 0
      %s107 = ssub.s32 %s104, %s106
      %p108 = scmp.eq.s32.totalorder %s107, 0
      %s110 = sadd.s32 %s109, 1
      %s111 = scalar_select %p108, %s109, %s110
      %p114 = pneg %p108
      %p115 = scmp.eq.s32.totalorder %s20, 7
      %p116 = por %p114, %p115
      %p117 = scmp.ne.s32.totalorder %s109, %s112
      %p118 = scmp.eq.s32.totalorder %s20, 0
      %p119 = por %p117, %p118
      %p120 = scmp.ne.s32.totalorder %s109, %s112
      %p121 = scmp.eq.s32.totalorder %s25, 7
      %p122 = por %p120, %p121
      %p123 = scmp.ne.s32.totalorder %s112, %s113
      %p124 = scmp.eq.s32.totalorder %s25, 0
      %p125 = por %p123, %p124
      %p126 = scmp.ne.s32.totalorder %s112, %s113
      %p127 = scmp.eq.s32.totalorder %s26, 7
      %p128 = por %p126, %p127
      %p130 = scmp.ne.s32.totalorder %s113, %s129
      %p131 = scmp.eq.s32.totalorder %s26, 0
      %p132 = por %p130, %p131
      %s133 = ssub.s32 %s29, %s38
      %s134 = ssub.s32 %s28, %s42
      %s135 = sor.u32 %s133, %s134
      %p136 = scmp.eq.s32.totalorder %s135, 0
      %s138 = sadd.s32 %s137, 1
      %s139 = scalar_select %p136, %s137, %s138
      %p142 = pneg %p136
      %p143 = scmp.eq.s32.totalorder %s20, 7
      %p144 = por %p142, %p143
      %p145 = scmp.ne.s32.totalorder %s137, %s140
      %p146 = scmp.eq.s32.totalorder %s20, 0
      %p147 = por %p145, %p146
      %p148 = scmp.ne.s32.totalorder %s137, %s140
      %p149 = scmp.eq.s32.totalorder %s25, 7
      %p150 = por %p148, %p149
      %p151 = scmp.ne.s32.totalorder %s140, %s141
      %p152 = scmp.eq.s32.totalorder %s25, 0
      %p153 = por %p151, %p152
      %p154 = scmp.ne.s32.totalorder %s140, %s141
      %p155 = scmp.eq.s32.totalorder %s26, 7
      %p156 = por %p154, %p155
      %p158 = scmp.ne.s32.totalorder %s141, %s157
      %p159 = scmp.eq.s32.totalorder %s26, 0
      %p160 = por %p158, %p159
      %s161 = ssub.s32 %s28, %s42
      %p162 = scmp.eq.s32.totalorder %s161, 0
      %s164 = sadd.s32 %s163, 1
      %s165 = scalar_select %p162, %s163, %s164
      %p168 = pneg %p162
      %p169 = scmp.eq.s32.totalorder %s20, 7
      %p170 = por %p168, %p169
      %p171 = scmp.ne.s32.totalorder %s163, %s166
      %p172 = scmp.eq.s32.totalorder %s20, 0
      %p173 = por %p171, %p172
      %p174 = scmp.ne.s32.totalorder %s163, %s166
      %p175 = scmp.eq.s32.totalorder %s25, 7
      %p176 = por %p174, %p175
      %p177 = scmp.ne.s32.totalorder %s166, %s167
      %p178 = scmp.eq.s32.totalorder %s25, 0
      %p179 = por %p177, %p178
      %p180 = scmp.ne.s32.totalorder %s166, %s167
      %p181 = scmp.eq.s32.totalorder %s26, 7
      %p182 = por %p180, %p181
      %p184 = scmp.ne.s32.totalorder %s167, %s183
      %p185 = scmp.eq.s32.totalorder %s26, 0
      %p186 = por %p184, %p185
      %s187 = ssub.s32 %s27, %s46
      %s188 = ssub.s32 %s28, %s42
      %s189 = sor.u32 %s187, %s188
      %p190 = scmp.eq.s32.totalorder %s189, 0
      %s192 = sadd.s32 %s191, 1
      %s193 = scalar_select %p190, %s191, %s192
      %p196 = pneg %p190
      %p197 = scmp.eq.s32.totalorder %s20, 7
      %p198 = por %p196, %p197
      %p199 = scmp.ne.s32.totalorder %s191, %s194
      %p200 = scmp.eq.s32.totalorder %s20, 0
      %p201 = por %p199, %p200
      %p202 = scmp.ne.s32.totalorder %s191, %s194
      %p203 = scmp.eq.s32.totalorder %s25, 7
      %p204 = por %p202, %p203
      %p205 = scmp.ne.s32.totalorder %s194, %s195
      %p206 = scmp.eq.s32.totalorder %s25, 0
      %p207 = por %p205, %p206
      %p208 = scmp.ne.s32.totalorder %s194, %s195
      %p209 = scmp.eq.s32.totalorder %s26, 7
      %p210 = por %p208, %p209
      %p212 = scmp.ne.s32.totalorder %s195, %s211
      %p213 = scmp.eq.s32.totalorder %s26, 0
      %p214 = por %p212, %p213
      %p215 = scmp.le.s32.totalorder 1, %s20
      %p216 = scmp.lt.s32.totalorder %s20, 9
      %p217 = pnand %p215, %p216
      %p218 = pneg %p217
      // Predicated region
      $region9: #{tpu_custom_call.1} parent=5 // pred_check
        _
      $region10: #{tpu_custom_call.1} parent=5 // pred_check_branch
        %220 = sbr.rel (%p217) target = $region12
      $region11: #{tpu_custom_call.1} parent=5 // pred_region
        %s221 = ssub.s32 %s20, 1
      $region12: #{tpu_custom_call.1} parent=5 // pred_fallthru
        _
      %p222 = scmp.lt.s32.totalorder %s20, 8
      // Predicated region
      $region13: #{tpu_custom_call.1} parent=5 // pred_check
        %p223 = pneg %p222
      $region14: #{tpu_custom_call.1} parent=5 // pred_check_branch
        %225 = sbr.rel (%p223) target = $region16
      $region15: #{tpu_custom_call.1} parent=5 // pred_region
        // Predicated region
        $region17: #{tpu_custom_call.1} parent=15 // pred_check
          %p226 = pneg %p59
        $region18: #{tpu_custom_call.1} parent=15 // pred_check_branch
          %228 = sbr.rel (%p226) target = $region20
        $region19: #{tpu_custom_call.1} parent=15 // pred_region
          %s229 = sand.u32 %s49, 1
          %s230 = scalar_lea.sflag [#allocation5], %s229
          %s231 = sand.u32 %s49, 1
          %s232 = smul.addr %s231, 32
          %s233 = scalar_lea.vmem [#allocation4], %s232
          %s234 = smul.u32 8, %s27
          %s236 = ssub.s32 512, 512
          %237 = vsyncadd %s230, %s236
          %s238 = smul.addr %s234, 64
          %s239 = scalar_lea.hbm %s0, %s238
          %s240 = sshll.u32 %s233, 4
          %s241 = int_to_ptr.vmem [resolvable:$true] %s240
          %246 = dma.hbm_to_vmem [thread:$0]  %s239, 512, %s241, %s230, 64, 64, 4
        $region20: #{tpu_custom_call.1} parent=15 // pred_fallthru
          _
        // Predicated region
        $region21: #{tpu_custom_call.1} parent=15 // pred_check
          %p247 = pneg %p89
        $region22: #{tpu_custom_call.1} parent=15 // pred_check_branch
          %249 = sbr.rel (%p247) target = $region24
        $region23: #{tpu_custom_call.1} parent=15 // pred_region
          %s250 = sand.u32 %s20, 1
          %s251 = scalar_lea.sflag [#allocation8], %s250
          %s252 = sand.u32 %s79, 1
          %s253 = smul.addr %s252, 128
          %s254 = scalar_lea.vmem [#allocation7], %s253
          %p255 = scmp.eq.s32.totalorder %s28, 0
          %s256 = scalar_select %p255, %s29, 0
          %s257 = smul.u32 2, %s256
          %s259 = ssub.s32 2048, 2048
          %260 = vsyncadd %s251, %s259
          %s261 = smul.addr %s257, 64
          %s262 = scalar_lea.hbm %s1, %s261
          %s263 = sshll.u32 %s254, 4
          %s264 = int_to_ptr.vmem [resolvable:$true] %s263
          %269 = dma.hbm_to_vmem [thread:$0]  %s262, 2048, %s264, %s251, 256, 128, 8
        $region24: #{tpu_custom_call.1} parent=15 // pred_fallthru
          _
        // Predicated region
        $region25: #{tpu_custom_call.1} parent=15 // pred_check
          %p270 = pneg %p119
        $region26: #{tpu_custom_call.1} parent=15 // pred_check_branch
          %272 = sbr.rel (%p270) target = $region28
        $region27: #{tpu_custom_call.1} parent=15 // pred_region
          %p273 = scmp.eq.s32.totalorder %s28, 0
          %s274 = scalar_select %p273, %s29, 0
          %s275 = smul.u32 2, %s274
          %p276 = scmp.lt.s32.totalorder %s275, 3
          %s277 = scalar_select %p276, %s275, 3
          %s278 = scalar_lea.vmem %s2, %s277
          %p279 = scmp.eq.s32.totalorder %s28, 0
          %s280 = scalar_select %p279, %s29, 0
          %s281 = smul.u32 2, %s280
        $region28: #{tpu_custom_call.1} parent=15 // pred_fallthru
          _
        // Predicated region
        $region29: #{tpu_custom_call.1} parent=15 // pred_check
          %p282 = pneg %p147
        $region30: #{tpu_custom_call.1} parent=15 // pred_check_branch
          %284 = sbr.rel (%p282) target = $region32
        $region31: #{tpu_custom_call.1} parent=15 // pred_region
          %s285 = sand.u32 %s20, 1
          %s286 = scalar_lea.sflag [#allocation8], %s285
          %s287 = sand.u32 %s137, 1
          %s288 = smul.addr %s287, 128
          %s289 = scalar_lea.vmem [#allocation9], %s288
          %s290 = smul.u32 32, %s29
          %s292 = ssub.s32 2048, 2048
          %293 = vsyncadd %s286, %s292
          %s294 = smul.addr %s290, 2
          %s295 = sadd.s32 %s28, %s294
          %s296 = smul.addr %s295, 64
          %s297 = scalar_lea.hbm %s3, %s296
          %s298 = sshll.u32 %s289, 4
          %s299 = int_to_ptr.vmem [resolvable:$true] %s298
          %304 = dma.hbm_to_vmem [thread:$0]  %s297, 2048, %s299, %s286, 128, 64, 4
        $region32: #{tpu_custom_call.1} parent=15 // pred_fallthru
          _
        // Predicated region
        $region33: #{tpu_custom_call.1} parent=15 // pred_check
          %p305 = pneg %p173
        $region34: #{tpu_custom_call.1} parent=15 // pred_check_branch
          %307 = sbr.rel (%p305) target = $region36
        $region35: #{tpu_custom_call.1} parent=15 // pred_region
          %p308 = scmp.lt.s32.totalorder %s28, 1
          %s309 = scalar_select %p308, %s28, 1
          %s310 = scalar_lea.vmem %s4, %s309
        $region36: #{tpu_custom_call.1} parent=15 // pred_fallthru
          _
      $region16: #{tpu_custom_call.1} parent=5 // pred_fallthru
        _
      %p311 = scmp.le.s32.totalorder 1, %s20
      %p312 = scmp.lt.s32.totalorder %s20, 9
      %p313 = pnand %p311, %p312
      %p314 = pneg %p313
      // Predicated region
      $region37: #{tpu_custom_call.1} parent=5 // pred_check
        _
      $region38: #{tpu_custom_call.1} parent=5 // pred_check_branch
        %316 = sbr.rel (%p313) target = $region40
      $region39: #{tpu_custom_call.1} parent=5 // pred_region
        %s317 = ssub.s32 %s20, 1
        %s318 = sand.u32 %s52, 1
        %s319 = scalar_lea.sflag [#allocation5], %s318
        %s320 = sand.u32 %s52, 1
        %s321 = smul.addr %s320, 32
        %s322 = scalar_lea.vmem [#allocation4], %s321
        // Predicated region
        $region41: #{tpu_custom_call.1} parent=39 // pred_check
          %p323 = pneg %p65
        $region42: #{tpu_custom_call.1} parent=39 // pred_check_branch
          %325 = sbr.rel (%p323) target = $region44
        $region43: #{tpu_custom_call.1} parent=39 // pred_region
          %326 = dma.done %s319, 512
        $region44: #{tpu_custom_call.1} parent=39 // pred_fallthru
          _
        %s327 = sand.u32 %s25, 1
        %s328 = scalar_lea.sflag [#allocation8], %s327
        %s329 = sand.u32 %s82, 1
        %s330 = smul.addr %s329, 128
        %s331 = scalar_lea.vmem [#allocation7], %s330
        // Predicated region
        $region45: #{tpu_custom_call.1} parent=39 // pred_check
          %p332 = pneg %p95
        $region46: #{tpu_custom_call.1} parent=39 // pred_check_branch
          %334 = sbr.rel (%p332) target = $region48
        $region47: #{tpu_custom_call.1} parent=39 // pred_region
          %335 = dma.done %s328, 2048
        $region48: #{tpu_custom_call.1} parent=39 // pred_fallthru
          _
        %s336 = sand.u32 %s25, 1
        %s337 = scalar_lea.sflag [#allocation8], %s336
        %s338 = sand.u32 %s140, 1
        %s339 = smul.addr %s338, 128
        %s340 = scalar_lea.vmem [#allocation9], %s339
        // Predicated region
        $region49: #{tpu_custom_call.1} parent=39 // pred_check
          %p341 = pneg %p153
        $region50: #{tpu_custom_call.1} parent=39 // pred_check_branch
          %343 = sbr.rel (%p341) target = $region52
        $region51: #{tpu_custom_call.1} parent=39 // pred_region
          %344 = dma.done %s337, 2048
        $region52: #{tpu_custom_call.1} parent=39 // pred_fallthru
          _
        %s345 = sand.u32 %s52, 1
        %s346 = scalar_lea.sflag [#allocation5], %s345
        %s347 = sand.u32 %s52, 1
        %s348 = smul.addr %s347, 32
        %s349 = scalar_lea.vmem [#allocation4], %s348
        %p350 = pneg %p65
        %p351 = pneg %p62
        %s352 = sand.u32 %s25, 1
        %s353 = scalar_lea.sflag [#allocation8], %s352
        %s354 = sand.u32 %s82, 1
        %s355 = smul.addr %s354, 128
        %s356 = scalar_lea.vmem [#allocation7], %s355
        %p357 = pneg %p95
        %p358 = pneg %p92
        %p359 = scmp.eq.s32.totalorder %s31, 0
        %s360 = scalar_select %p359, %s32, 0
        %s361 = smul.u32 2, %s360
        %p362 = scmp.lt.s32.totalorder %s361, 3
        %s363 = scalar_select %p362, %s361, 3
        %s364 = scalar_lea.vmem %s2, %s363
        %p365 = pneg %p125
        %p366 = pneg %p122
        %s367 = sand.u32 %s25, 1
        %s368 = scalar_lea.sflag [#allocation8], %s367
        %s369 = sand.u32 %s140, 1
        %s370 = smul.addr %s369, 128
        %s371 = scalar_lea.vmem [#allocation9], %s370
        %p372 = pneg %p153
        %p373 = pneg %p150
        %p374 = scmp.lt.s32.totalorder %s31, 1
        %s375 = scalar_select %p374, %s31, 1
        %s376 = scalar_lea.vmem %s4, %s375
        %p377 = pneg %p179
        %p378 = pneg %p176
        %p379 = pneg %p207
        %p380 = pneg %p204
        %s381 = sand.u32 %s194, 1
        %s382 = scalar_lea.sflag [#allocation6], %s381
        %s383 = sand.u32 %s194, 1
        %s384 = smul.addr %s383, 64
        %s385 = scalar_lea.vmem [#allocation10], %s384
        %s386 = smul.u32 8, %s30
        %p387 = scmp.eq.s32.totalorder %s31, 0
        %s388 = scalar_select %p387, %s32, 0
        %s389 = smul.u32 2, %s388
        %p390 = scmp.eq.s32.totalorder %s31, 0
        %s391 = scalar_select %p390, %s32, 0
        %s392 = smul.u32 2, %s391
        %p393 = scmp.lt.s32.totalorder %s392, 3
        %s394 = scalar_select %p393, %s392, 3
        %s395 = scalar_lea.vmem %s2, %s394
        %p396 = scmp.eq.s32.totalorder %s31, 0
        %s397 = scalar_select %p396, %s32, 0
        %s398 = smul.u32 2, %s397
        %s399 = smul.u32 32, %s32
        %p400 = scmp.lt.s32.totalorder %s31, 1
        %s401 = scalar_select %p400, %s31, 1
        %s402 = scalar_lea.vmem %s4, %s401
        %s403 = smul.u32 8, %s30
        %p405 = scmp.eq.s32.totalorder %s32, 0
        // Predicated region
        $region53: #{tpu_custom_call.1} parent=39 // pred_check
          %p406 = pneg %p405
        $region54: #{tpu_custom_call.1} parent=39 // pred_check_branch
          %408 = sbr.rel (%p406) target = $region56
        $region55: #{tpu_custom_call.1} parent=39 // pred_region
          %409 = vst [vmem:[#allocation3] sm:$0xff] 0.0
          %410 = vst [vmem:[#allocation3 + $0x8] sm:$0xff] 0.0
          %411 = vst [vmem:[#allocation3 + $0x10] sm:$0xff] 0.0
          %412 = vst [vmem:[#allocation3 + $0x18] sm:$0xff] 0.0
          %413 = vst [vmem:[#allocation3 + $0x20] sm:$0xff] 0.0
          %414 = vst [vmem:[#allocation3 + $0x28] sm:$0xff] 0.0
          %415 = vst [vmem:[#allocation3 + $0x30] sm:$0xff] 0.0
          %416 = vst [vmem:[#allocation3 + $0x38] sm:$0xff] 0.0
        $region56: #{tpu_custom_call.1} parent=39 // pred_fallthru
          _
        %p417 = scmp.eq.s32.totalorder %s31, 0
        // Predicated region
        $region57: #{tpu_custom_call.1} parent=39 // pred_check
          %p418 = pneg %p417
        $region58: #{tpu_custom_call.1} parent=39 // pred_check_branch
          %420 = sbr.rel (%p418) target = $region60
        $region59: #{tpu_custom_call.1} parent=39 // pred_region
          %v421 = vld [vmem:[%s322] sm:$0xf]
          %v422 = vld [vmem:[%s322 + $0x4] sm:$0xf]
          %v423 = vld [vmem:[%s322 + $0x8] sm:$0xf]
          %v424 = vld [vmem:[%s322 + $0xc] sm:$0xf]
          %v425 = vld [vmem:[%s322 + $0x10] sm:$0xf]
          %v426 = vld [vmem:[%s322 + $0x14] sm:$0xf]
          %v427 = vld [vmem:[%s322 + $0x18] sm:$0xf]
          %v428 = vld [vmem:[%s322 + $0x1c] sm:$0xf]
          %v429 = vld [vmem:[%s331] sm:$0xff]
          %v430 = vld [vmem:[%s331 + $0x8] sm:$0xff]
          %v431 = vld [vmem:[%s331 + $0x10] sm:$0xff]
          %v432 = vld [vmem:[%s331 + $0x18] sm:$0xff]
          %v433 = vld [vmem:[%s331 + $0x20] sm:$0xff]
          %v434 = vld [vmem:[%s331 + $0x28] sm:$0xff]
          %v435 = vld [vmem:[%s331 + $0x30] sm:$0xff]
          %v436 = vld [vmem:[%s331 + $0x38] sm:$0xff]
          %v437 = vld [vmem:[%s331 + $0x40] sm:$0xff]
          %v438 = vld [vmem:[%s331 + $0x48] sm:$0xff]
          %v439 = vld [vmem:[%s331 + $0x50] sm:$0xff]
          %v440 = vld [vmem:[%s331 + $0x58] sm:$0xff]
          %v441 = vld [vmem:[%s331 + $0x60] sm:$0xff]
          %v442 = vld [vmem:[%s331 + $0x68] sm:$0xff]
          %v443 = vld [vmem:[%s331 + $0x70] sm:$0xff]
          %v444 = vld [vmem:[%s331 + $0x78] sm:$0xff]
          %v445 = vld [vmem:[%s395] sm:$0x3]
          %v447 = vlaneseq
          %v448 = vshrl.u32 %v447, 7
          %v449 = vsub.s32 0, %v448
          %v450 = vrot.slane %v445, %v449
          %v451 = vlaneseq
          %v452 = vshrl.u32 %v451, 7
          %v453 = vsub.s32 1, %v452
          %v454 = vrot.slane %v445, %v453
          %v465 = vunpack.c.l.b16 %v421
          %v466 = vunpack.c.l.b16 %v422
          %v467 = vunpack.c.l.b16 %v423
          %v468 = vunpack.c.l.b16 %v424
          %v469 = vunpack.c.l.b16 %v425
          %v470 = vunpack.c.l.b16 %v426
          %v471 = vunpack.c.l.b16 %v427
          %v472 = vunpack.c.l.b16 %v428
          %v473 = vpack.c.b16 %v466, %v465
          %v474 = vpack.c.b16 %v468, %v467
          %v475 = vpack.c.b16 %v470, %v469
          %v476 = vpack.c.b16 %v472, %v471
          %v497 = vunpack.c.l.b16 %v429
          %v498 = vunpack.c.h.b16 %v429
          %v499 = vunpack.c.l.b16 %v430
          %v500 = vunpack.c.h.b16 %v430
          %v501 = vunpack.c.l.b16 %v431
          %v502 = vunpack.c.h.b16 %v431
          %v503 = vunpack.c.l.b16 %v432
          %v504 = vunpack.c.h.b16 %v432
          %v505 = vunpack.c.l.b16 %v433
          %v506 = vunpack.c.h.b16 %v433
          %v507 = vunpack.c.l.b16 %v434
          %v508 = vunpack.c.h.b16 %v434
          %v509 = vunpack.c.l.b16 %v435
          %v510 = vunpack.c.h.b16 %v435
          %v511 = vunpack.c.l.b16 %v436
          %v512 = vunpack.c.h.b16 %v436
          %v513 = vunpack.c.l.b16 %v437
          %v514 = vunpack.c.h.b16 %v437
          %v515 = vunpack.c.l.b16 %v438
          %v516 = vunpack.c.h.b16 %v438
          %v517 = vunpack.c.l.b16 %v439
          %v518 = vunpack.c.h.b16 %v439
          %v519 = vunpack.c.l.b16 %v440
          %v520 = vunpack.c.h.b16 %v440
          %v521 = vunpack.c.l.b16 %v441
          %v522 = vunpack.c.h.b16 %v441
          %v523 = vunpack.c.l.b16 %v442
          %v524 = vunpack.c.h.b16 %v442
          %v525 = vunpack.c.l.b16 %v443
          %v526 = vunpack.c.h.b16 %v443
          %v527 = vunpack.c.l.b16 %v444
          %v528 = vunpack.c.h.b16 %v444
          %v529 = vpack.c.b16 %v499, %v497
          %v530 = vpack.c.b16 %v500, %v498
          %v531 = vpack.c.b16 %v503, %v501
          %v532 = vpack.c.b16 %v504, %v502
          %v533 = vpack.c.b16 %v507, %v505
          %v534 = vpack.c.b16 %v508, %v506
          %v535 = vpack.c.b16 %v511, %v509
          %v536 = vpack.c.b16 %v512, %v510
          %v537 = vpack.c.b16 %v515, %v513
          %v538 = vpack.c.b16 %v516, %v514
          %v539 = vpack.c.b16 %v519, %v517
          %v540 = vpack.c.b16 %v520, %v518
          %v541 = vpack.c.b16 %v523, %v521
          %v542 = vpack.c.b16 %v524, %v522
          %v543 = vpack.c.b16 %v527, %v525
          %v544 = vpack.c.b16 %v528, %v526
          %561 = vmatprep.subr.bf16.mxu0 %v530
          %562 = vmatpush1.bf16.msra.mxu0 %v529
          %563 = vmatprep.subr.bf16.mxu0 %v532
          %564 = vmatpush1.bf16.msra.mxu0 %v531
          %565 = vmatprep.subr.bf16.mxu0 %v534
          %566 = vmatpush1.bf16.msra.mxu0 %v533
          %567 = vmatprep.subr.bf16.mxu0 %v536
          %568 = vmatpush1.bf16.msra.mxu0 %v535
          %569 = vmatprep.subr.bf16.mxu0 %v538
          %570 = vmatpush1.bf16.msra.mxu0 %v537
          %571 = vmatprep.subr.bf16.mxu0 %v540
          %572 = vmatpush1.bf16.msra.mxu0 %v539
          %573 = vmatprep.subr.bf16.mxu0 %v542
          %574 = vmatpush1.bf16.msra.mxu0 %v541
          %575 = vmatprep.subr.bf16.mxu0 %v544
          %576 = vmatpush1.bf16.msra.mxu0 %v543
          %577 = vmatprep.subr.bf16.mxu0 0
          %578 = vmatpush1.bf16.msra.mxu0 0
          %579 = vmatprep.subr.bf16.mxu0 0
          %580 = vmatpush1.bf16.msra.mxu0 0
          %581 = vmatprep.subr.bf16.mxu0 0
          %582 = vmatpush1.bf16.msra.mxu0 0
          %583 = vmatprep.subr.bf16.mxu0 0
          %584 = vmatpush1.bf16.msra.mxu0 0
          %585 = vmatprep.subr.bf16.mxu0 0
          %586 = vmatpush1.bf16.msra.mxu0 0
          %587 = vmatprep.subr.bf16.mxu0 0
          %588 = vmatpush1.bf16.msra.mxu0 0
          %589 = vmatprep.subr.bf16.mxu0 0
          %590 = vmatpush1.bf16.msra.mxu0 0
          %591 = vmatprep.subr.bf16.mxu0 0
          %592 = vmatpush1.bf16.msra.mxu0 0
          %593 = vmatprep.mubr.bf16.mxu0 0
          %594 = vmatmul.mubr.bf16.gmra.mrb[0].mxu0 %v473
          %v595 = vpop.f32.mrb[0].mxu0
          %v596 = vadd.f32 %v450, %v595
          %v597 = vpop.f32.mrb[0].mxu0
          %v598 = vadd.f32 %v454, %v597
          %v599 = vpop.f32.mrb[0].mxu0
          %v600 = vadd.f32 %v450, %v599
          %v601 = vpop.f32.mrb[0].mxu0
          %v602 = vadd.f32 %v454, %v601
          %603 = vmatprep.mubr.bf16.mxu0 0
          %604 = vmatmul.mubr.bf16.gmra.mrb[0].mxu0 %v474
          %v605 = vpop.f32.mrb[0].mxu0
          %v606 = vadd.f32 %v450, %v605
          %v607 = vpop.f32.mrb[0].mxu0
          %v608 = vadd.f32 %v454, %v607
          %v609 = vpop.f32.mrb[0].mxu0
          %v610 = vadd.f32 %v450, %v609
          %v611 = vpop.f32.mrb[0].mxu0
          %v612 = vadd.f32 %v454, %v611
          %613 = vmatprep.mubr.bf16.mxu0 0
          %614 = vmatmul.mubr.bf16.gmra.mrb[0].mxu0 %v475
          %v615 = vpop.f32.mrb[0].mxu0
          %v616 = vadd.f32 %v450, %v615
          %v617 = vpop.f32.mrb[0].mxu0
          %v618 = vadd.f32 %v454, %v617
          %v619 = vpop.f32.mrb[0].mxu0
          %v620 = vadd.f32 %v450, %v619
          %v621 = vpop.f32.mrb[0].mxu0
          %v622 = vadd.f32 %v454, %v621
          %623 = vmatprep.mubr.bf16.mxu0 0
          %624 = vmatmul.mubr.bf16.gmra.mrb[0].mxu0 %v476
          %v625 = vpop.f32.mrb[0].mxu0
          %v626 = vadd.f32 %v450, %v625
          %v627 = vpop.f32.mrb[0].mxu0
          %v628 = vadd.f32 %v454, %v627
          %v629 = vpop.f32.mrb[0].mxu0
          %v630 = vadd.f32 %v450, %v629
          %v631 = vpop.f32.mrb[0].mxu0
          %v632 = vadd.f32 %v454, %v631
          %633 = vdwg.mxu0
          %v634 = vxor.u32 %v596, 2147483648
          %v635 = vxor.u32 %v598, 2147483648
          %v636 = vxor.u32 %v600, 2147483648
          %v637 = vxor.u32 %v602, 2147483648
          %v638 = vxor.u32 %v606, 2147483648
          %v639 = vxor.u32 %v608, 2147483648
          %v640 = vxor.u32 %v610, 2147483648
          %v641 = vxor.u32 %v612, 2147483648
          %v642 = vxor.u32 %v616, 2147483648
          %v643 = vxor.u32 %v618, 2147483648
          %v644 = vxor.u32 %v620, 2147483648
          %v645 = vxor.u32 %v622, 2147483648
          %v646 = vxor.u32 %v626, 2147483648
          %v647 = vxor.u32 %v628, 2147483648
          %v648 = vxor.u32 %v630, 2147483648
          %v649 = vxor.u32 %v632, 2147483648
          %v650 = vmul.f32 %v634, 1.442695
          %v651 = vpow.pop %v650
          %v652 = vmul.f32 %v635, 1.442695
          %v653 = vpow.pop %v652
          %v654 = vmul.f32 %v636, 1.442695
          %v655 = vpow.pop %v654
          %v656 = vmul.f32 %v637, 1.442695
          %v657 = vpow.pop %v656
          %v658 = vmul.f32 %v638, 1.442695
          %v659 = vpow.pop %v658
          %v660 = vmul.f32 %v639, 1.442695
          %v661 = vpow.pop %v660
          %v662 = vmul.f32 %v640, 1.442695
          %v663 = vpow.pop %v662
          %v664 = vmul.f32 %v641, 1.442695
          %v665 = vpow.pop %v664
          %v666 = vmul.f32 %v642, 1.442695
          %v667 = vpow.pop %v666
          %v668 = vmul.f32 %v643, 1.442695
          %v669 = vpow.pop %v668
          %v670 = vmul.f32 %v644, 1.442695
          %v671 = vpow.pop %v670
          %v672 = vmul.f32 %v645, 1.442695
          %v673 = vpow.pop %v672
          %v674 = vmul.f32 %v646, 1.442695
          %v675 = vpow.pop %v674
          %v676 = vmul.f32 %v647, 1.442695
          %v677 = vpow.pop %v676
          %v678 = vmul.f32 %v648, 1.442695
          %v679 = vpow.pop %v678
          %v680 = vmul.f32 %v649, 1.442695
          %v681 = vpow.pop %v680
          %v682 = vadd.f32 %v651, 1.0
          %v683 = vadd.f32 %v653, 1.0
          %v684 = vadd.f32 %v655, 1.0
          %v685 = vadd.f32 %v657, 1.0
          %v686 = vadd.f32 %v659, 1.0
          %v687 = vadd.f32 %v661, 1.0
          %v688 = vadd.f32 %v663, 1.0
          %v689 = vadd.f32 %v665, 1.0
          %v690 = vadd.f32 %v667, 1.0
          %v691 = vadd.f32 %v669, 1.0
          %v692 = vadd.f32 %v671, 1.0
          %v693 = vadd.f32 %v673, 1.0
          %v694 = vadd.f32 %v675, 1.0
          %v695 = vadd.f32 %v677, 1.0
          %v696 = vadd.f32 %v679, 1.0
          %v697 = vadd.f32 %v681, 1.0
          %v698 = vrcp.pop %v682
          %v699 = vmul.f32 1.0, %v698
          %v700 = vrcp.pop %v683
          %v701 = vmul.f32 1.0, %v700
          %v702 = vrcp.pop %v684
          %v703 = vmul.f32 1.0, %v702
          %v704 = vrcp.pop %v685
          %v705 = vmul.f32 1.0, %v704
          %v706 = vrcp.pop %v686
          %v707 = vmul.f32 1.0, %v706
          %v708 = vrcp.pop %v687
          %v709 = vmul.f32 1.0, %v708
          %v710 = vrcp.pop %v688
          %v711 = vmul.f32 1.0, %v710
          %v712 = vrcp.pop %v689
          %v713 = vmul.f32 1.0, %v712
          %v714 = vrcp.pop %v690
          %v715 = vmul.f32 1.0, %v714
          %v716 = vrcp.pop %v691
          %v717 = vmul.f32 1.0, %v716
          %v718 = vrcp.pop %v692
          %v719 = vmul.f32 1.0, %v718
          %v720 = vrcp.pop %v693
          %v721 = vmul.f32 1.0, %v720
          %v722 = vrcp.pop %v694
          %v723 = vmul.f32 1.0, %v722
          %v724 = vrcp.pop %v695
          %v725 = vmul.f32 1.0, %v724
          %v726 = vrcp.pop %v696
          %v727 = vmul.f32 1.0, %v726
          %v728 = vrcp.pop %v697
          %v729 = vmul.f32 1.0, %v728
          %v730 = vmul.f32 %v596, %v699
          %v731 = vmul.f32 %v598, %v701
          %v732 = vmul.f32 %v600, %v703
          %v733 = vmul.f32 %v602, %v705
          %v734 = vmul.f32 %v606, %v707
          %v735 = vmul.f32 %v608, %v709
          %v736 = vmul.f32 %v610, %v711
          %v737 = vmul.f32 %v612, %v713
          %v738 = vmul.f32 %v616, %v715
          %v739 = vmul.f32 %v618, %v717
          %v740 = vmul.f32 %v620, %v719
          %v741 = vmul.f32 %v622, %v721
          %v742 = vmul.f32 %v626, %v723
          %v743 = vmul.f32 %v628, %v725
          %v744 = vmul.f32 %v630, %v727
          %v745 = vmul.f32 %v632, %v729
          %v746 = vpack.c.bf16 %v732, %v730
          %v747 = vpack.c.bf16 %v733, %v731
          %v748 = vpack.c.bf16 %v736, %v734
          %v749 = vpack.c.bf16 %v737, %v735
          %v750 = vpack.c.bf16 %v740, %v738
          %v751 = vpack.c.bf16 %v741, %v739
          %v752 = vpack.c.bf16 %v744, %v742
          %v753 = vpack.c.bf16 %v745, %v743
          %s754 = smul.u32 %s32, 8
          %s755 = smul.addr %s754, 8
          %s756 = scalar_lea.vmem [#allocation2], %s755
          %757 = vst [vmem:[%s756] sm:$0xff] %v746
          %758 = vst [vmem:[%s756 + $0x8] sm:$0xff] %v747
          %759 = vst [vmem:[%s756 + $0x10] sm:$0xff] %v748
          %760 = vst [vmem:[%s756 + $0x18] sm:$0xff] %v749
          %761 = vst [vmem:[%s756 + $0x20] sm:$0xff] %v750
          %762 = vst [vmem:[%s756 + $0x28] sm:$0xff] %v751
          %763 = vst [vmem:[%s756 + $0x30] sm:$0xff] %v752
          %764 = vst [vmem:[%s756 + $0x38] sm:$0xff] %v753
        $region60: #{tpu_custom_call.1} parent=39 // pred_fallthru
          _
        %v765 = vld [vmem:[#allocation3] sm:$0xff]
        %v766 = vld [vmem:[#allocation3 + $0x8] sm:$0xff]
        %v767 = vld [vmem:[#allocation3 + $0x10] sm:$0xff]
        %v768 = vld [vmem:[#allocation3 + $0x18] sm:$0xff]
        %v769 = vld [vmem:[#allocation3 + $0x20] sm:$0xff]
        %v770 = vld [vmem:[#allocation3 + $0x28] sm:$0xff]
        %v771 = vld [vmem:[#allocation3 + $0x30] sm:$0xff]
        %v772 = vld [vmem:[#allocation3 + $0x38] sm:$0xff]
        %s773 = smul.u32 %s32, 8
        %s774 = smul.addr %s773, 8
        %s775 = scalar_lea.vmem [#allocation2], %s774
        %v776 = vld [vmem:[%s775] sm:$0xff]
        %v777 = vld [vmem:[%s775 + $0x8] sm:$0xff]
        %v778 = vld [vmem:[%s775 + $0x10] sm:$0xff]
        %v779 = vld [vmem:[%s775 + $0x18] sm:$0xff]
        %v780 = vld [vmem:[%s775 + $0x20] sm:$0xff]
        %v781 = vld [vmem:[%s775 + $0x28] sm:$0xff]
        %v782 = vld [vmem:[%s775 + $0x30] sm:$0xff]
        %v783 = vld [vmem:[%s775 + $0x38] sm:$0xff]
        %v784 = vld [vmem:[%s340] sm:$0xf]
        %v785 = vld [vmem:[%s340 + $0x4] sm:$0xf]
        %v786 = vld [vmem:[%s340 + $0x8] sm:$0xf]
        %v787 = vld [vmem:[%s340 + $0xc] sm:$0xf]
        %v788 = vld [vmem:[%s340 + $0x10] sm:$0xf]
        %v789 = vld [vmem:[%s340 + $0x14] sm:$0xf]
        %v790 = vld [vmem:[%s340 + $0x18] sm:$0xf]
        %v791 = vld [vmem:[%s340 + $0x1c] sm:$0xf]
        %v792 = vld [vmem:[%s340 + $0x20] sm:$0xf]
        %v793 = vld [vmem:[%s340 + $0x24] sm:$0xf]
        %v794 = vld [vmem:[%s340 + $0x28] sm:$0xf]
        %v795 = vld [vmem:[%s340 + $0x2c] sm:$0xf]
        %v796 = vld [vmem:[%s340 + $0x30] sm:$0xf]
        %v797 = vld [vmem:[%s340 + $0x34] sm:$0xf]
        %v798 = vld [vmem:[%s340 + $0x38] sm:$0xf]
        %v799 = vld [vmem:[%s340 + $0x3c] sm:$0xf]
        %v800 = vld [vmem:[%s340 + $0x40] sm:$0xf]
        %v801 = vld [vmem:[%s340 + $0x44] sm:$0xf]
        %v802 = vld [vmem:[%s340 + $0x48] sm:$0xf]
        %v803 = vld [vmem:[%s340 + $0x4c] sm:$0xf]
        %v804 = vld [vmem:[%s340 + $0x50] sm:$0xf]
        %v805 = vld [vmem:[%s340 + $0x54] sm:$0xf]
        %v806 = vld [vmem:[%s340 + $0x58] sm:$0xf]
        %v807 = vld [vmem:[%s340 + $0x5c] sm:$0xf]
        %v808 = vld [vmem:[%s340 + $0x60] sm:$0xf]
        %v809 = vld [vmem:[%s340 + $0x64] sm:$0xf]
        %v810 = vld [vmem:[%s340 + $0x68] sm:$0xf]
        %v811 = vld [vmem:[%s340 + $0x6c] sm:$0xf]
        %v812 = vld [vmem:[%s340 + $0x70] sm:$0xf]
        %v813 = vld [vmem:[%s340 + $0x74] sm:$0xf]
        %v814 = vld [vmem:[%s340 + $0x78] sm:$0xf]
        %v815 = vld [vmem:[%s340 + $0x7c] sm:$0xf]
        %v848 = vunpack.c.l.b16 %v784
        %v849 = vunpack.c.l.b16 %v785
        %v850 = vunpack.c.l.b16 %v786
        %v851 = vunpack.c.l.b16 %v787
        %v852 = vunpack.c.l.b16 %v788
        %v853 = vunpack.c.l.b16 %v789
        %v854 = vunpack.c.l.b16 %v790
        %v855 = vunpack.c.l.b16 %v791
        %v856 = vunpack.c.l.b16 %v792
        %v857 = vunpack.c.l.b16 %v793
        %v858 = vunpack.c.l.b16 %v794
        %v859 = vunpack.c.l.b16 %v795
        %v860 = vunpack.c.l.b16 %v796
        %v861 = vunpack.c.l.b16 %v797
        %v862 = vunpack.c.l.b16 %v798
        %v863 = vunpack.c.l.b16 %v799
        %v864 = vunpack.c.l.b16 %v800
        %v865 = vunpack.c.l.b16 %v801
        %v866 = vunpack.c.l.b16 %v802
        %v867 = vunpack.c.l.b16 %v803
        %v868 = vunpack.c.l.b16 %v804
        %v869 = vunpack.c.l.b16 %v805
        %v870 = vunpack.c.l.b16 %v806
        %v871 = vunpack.c.l.b16 %v807
        %v872 = vunpack.c.l.b16 %v808
        %v873 = vunpack.c.l.b16 %v809
        %v874 = vunpack.c.l.b16 %v810
        %v875 = vunpack.c.l.b16 %v811
        %v876 = vunpack.c.l.b16 %v812
        %v877 = vunpack.c.l.b16 %v813
        %v878 = vunpack.c.l.b16 %v814
        %v879 = vunpack.c.l.b16 %v815
        %v880 = vpack.c.b16 %v849, %v848
        %v881 = vpack.c.b16 %v851, %v850
        %v882 = vpack.c.b16 %v853, %v852
        %v883 = vpack.c.b16 %v855, %v854
        %v884 = vpack.c.b16 %v857, %v856
        %v885 = vpack.c.b16 %v859, %v858
        %v886 = vpack.c.b16 %v861, %v860
        %v887 = vpack.c.b16 %v863, %v862
        %v888 = vpack.c.b16 %v865, %v864
        %v889 = vpack.c.b16 %v867, %v866
        %v890 = vpack.c.b16 %v869, %v868
        %v891 = vpack.c.b16 %v871, %v870
        %v892 = vpack.c.b16 %v873, %v872
        %v893 = vpack.c.b16 %v875, %v874
        %v894 = vpack.c.b16 %v877, %v876
        %v895 = vpack.c.b16 %v879, %v878
        %912 = vmatprep.subr.bf16.mxu0 0
        %913 = vmatpush1.bf16.msra.mxu0 %v880
        %914 = vmatprep.subr.bf16.mxu0 0
        %915 = vmatpush1.bf16.msra.mxu0 %v881
        %916 = vmatprep.subr.bf16.mxu0 0
        %917 = vmatpush1.bf16.msra.mxu0 %v882
        %918 = vmatprep.subr.bf16.mxu0 0
        %919 = vmatpush1.bf16.msra.mxu0 %v883
        %920 = vmatprep.subr.bf16.mxu0 0
        %921 = vmatpush1.bf16.msra.mxu0 %v884
        %922 = vmatprep.subr.bf16.mxu0 0
        %923 = vmatpush1.bf16.msra.mxu0 %v885
        %924 = vmatprep.subr.bf16.mxu0 0
        %925 = vmatpush1.bf16.msra.mxu0 %v886
        %926 = vmatprep.subr.bf16.mxu0 0
        %927 = vmatpush1.bf16.msra.mxu0 %v887
        %928 = vmatprep.subr.bf16.mxu0 0
        %929 = vmatpush1.bf16.msra.mxu0 %v888
        %930 = vmatprep.subr.bf16.mxu0 0
        %931 = vmatpush1.bf16.msra.mxu0 %v889
        %932 = vmatprep.subr.bf16.mxu0 0
        %933 = vmatpush1.bf16.msra.mxu0 %v890
        %934 = vmatprep.subr.bf16.mxu0 0
        %935 = vmatpush1.bf16.msra.mxu0 %v891
        %936 = vmatprep.subr.bf16.mxu0 0
        %937 = vmatpush1.bf16.msra.mxu0 %v892
        %938 = vmatprep.subr.bf16.mxu0 0
        %939 = vmatpush1.bf16.msra.mxu0 %v893
        %940 = vmatprep.subr.bf16.mxu0 0
        %941 = vmatpush1.bf16.msra.mxu0 %v894
        %942 = vmatprep.subr.bf16.mxu0 0
        %943 = vmatpush1.bf16.msra.mxu0 %v895
        %944 = vmatprep.mubr.bf16.mxu0 %v777
        %945 = vmatmul.mubr.bf16.gmra.mrb[0].mxu0 %v776
        %v946 = vpop.f32.mrb[0].mxu0
        %v947 = vadd.f32 0.0, %v946
        %v948 = vpop.f32.mrb[0].mxu0
        %v949 = vpop.f32.mrb[0].mxu0
        %v950 = vadd.f32 0.0, %v949
        %v951 = vpop.f32.mrb[0].mxu0
        %952 = vmatprep.mubr.bf16.mxu0 %v779
        %953 = vmatmul.mubr.bf16.gmra.mrb[0].mxu0 %v778
        %v954 = vpop.f32.mrb[0].mxu0
        %v955 = vadd.f32 0.0, %v954
        %v956 = vpop.f32.mrb[0].mxu0
        %v957 = vpop.f32.mrb[0].mxu0
        %v958 = vadd.f32 0.0, %v957
        %v959 = vpop.f32.mrb[0].mxu0
        %960 = vmatprep.mubr.bf16.mxu0 %v781
        %961 = vmatmul.mubr.bf16.gmra.mrb[0].mxu0 %v780
        %v962 = vpop.f32.mrb[0].mxu0
        %v963 = vadd.f32 0.0, %v962
        %v964 = vpop.f32.mrb[0].mxu0
        %v965 = vpop.f32.mrb[0].mxu0
        %v966 = vadd.f32 0.0, %v965
        %v967 = vpop.f32.mrb[0].mxu0
        %968 = vmatprep.mubr.bf16.mxu0 %v783
        %969 = vmatmul.mubr.bf16.gmra.mrb[0].mxu0 %v782
        %v970 = vpop.f32.mrb[0].mxu0
        %v971 = vadd.f32 0.0, %v970
        %v972 = vpop.f32.mrb[0].mxu0
        %v973 = vpop.f32.mrb[0].mxu0
        %v974 = vadd.f32 0.0, %v973
        %v975 = vpop.f32.mrb[0].mxu0
        %976 = vdwg.mxu0
        %v977 = vadd.f32 %v765, %v947
        %v978 = vadd.f32 %v766, %v950
        %v979 = vadd.f32 %v767, %v955
        %v980 = vadd.f32 %v768, %v958
        %v981 = vadd.f32 %v769, %v963
        %v982 = vadd.f32 %v770, %v966
        %v983 = vadd.f32 %v771, %v971
        %v984 = vadd.f32 %v772, %v974
        %985 = vst [vmem:[#allocation3] sm:$0xff] %v977
        %986 = vst [vmem:[#allocation3 + $0x8] sm:$0xff] %v978
        %987 = vst [vmem:[#allocation3 + $0x10] sm:$0xff] %v979
        %988 = vst [vmem:[#allocation3 + $0x18] sm:$0xff] %v980
        %989 = vst [vmem:[#allocation3 + $0x20] sm:$0xff] %v981
        %990 = vst [vmem:[#allocation3 + $0x28] sm:$0xff] %v982
        %991 = vst [vmem:[#allocation3 + $0x30] sm:$0xff] %v983
        %992 = vst [vmem:[#allocation3 + $0x38] sm:$0xff] %v984
        %p993 = scmp.eq.s32.totalorder %s32, 1
        // Predicated region
        $region61: #{tpu_custom_call.1} parent=39 // pred_check
          %p994 = pneg %p993
        $region62: #{tpu_custom_call.1} parent=39 // pred_check_branch
          %996 = sbr.rel (%p994) target = $region64
        $region63: #{tpu_custom_call.1} parent=39 // pred_region
          %v997 = vld [vmem:[#allocation3] sm:$0xff]
          %v998 = vld [vmem:[#allocation3 + $0x8] sm:$0xff]
          %v999 = vld [vmem:[#allocation3 + $0x10] sm:$0xff]
          %v1000 = vld [vmem:[#allocation3 + $0x18] sm:$0xff]
          %v1001 = vld [vmem:[#allocation3 + $0x20] sm:$0xff]
          %v1002 = vld [vmem:[#allocation3 + $0x28] sm:$0xff]
          %v1003 = vld [vmem:[#allocation3 + $0x30] sm:$0xff]
          %v1004 = vld [vmem:[#allocation3 + $0x38] sm:$0xff]
          %v1005 = vld [vmem:[%s402] sm:$0x1]
          %v1007 = vlaneseq
          %v1008 = vshrl.u32 %v1007, 7
          %v1009 = vsub.s32 0, %v1008
          %v1010 = vrot.slane %v1005, %v1009
          %v1012 = vadd.f32 %v997, %v1010
          %v1013 = vadd.f32 %v998, %v1010
          %v1014 = vadd.f32 %v999, %v1010
          %v1015 = vadd.f32 %v1000, %v1010
          %v1016 = vadd.f32 %v1001, %v1010
          %v1017 = vadd.f32 %v1002, %v1010
          %v1018 = vadd.f32 %v1003, %v1010
          %v1019 = vadd.f32 %v1004, %v1010
          %1020 = vst [vmem:[%s385] sm:$0xff] %v1012
          %1021 = vst [vmem:[%s385 + $0x8] sm:$0xff] %v1013
          %1022 = vst [vmem:[%s385 + $0x10] sm:$0xff] %v1014
          %1023 = vst [vmem:[%s385 + $0x18] sm:$0xff] %v1015
          %1024 = vst [vmem:[%s385 + $0x20] sm:$0xff] %v1016
          %1025 = vst [vmem:[%s385 + $0x28] sm:$0xff] %v1017
          %1026 = vst [vmem:[%s385 + $0x30] sm:$0xff] %v1018
          %1027 = vst [vmem:[%s385 + $0x38] sm:$0xff] %v1019
        $region64: #{tpu_custom_call.1} parent=39 // pred_fallthru
          _
        %s1028 = sand.u32 %s194, 1
        %s1029 = scalar_lea.sflag [#allocation6], %s1028
        %s1030 = sand.u32 %s194, 1
        %s1031 = smul.addr %s1030, 64
        %s1032 = scalar_lea.vmem [#allocation10], %s1031
        // Predicated region
        $region65: #{tpu_custom_call.1} parent=39 // pred_check
          %p1033 = pneg %p204
        $region66: #{tpu_custom_call.1} parent=39 // pred_check_branch
          %1035 = sbr.rel (%p1033) target = $region68
        $region67: #{tpu_custom_call.1} parent=39 // pred_region
          %s1036 = smul.u32 8, %s30
          %s1038 = ssub.s32 1024, 1024
          %1039 = vsyncadd %s1029, %s1038
          %s1040 = smul.addr %s1036, 2
          %s1041 = sadd.s32 %s31, %s1040
          %s1042 = smul.addr %s1041, 128
          %s1043 = scalar_lea.hbm %s5, %s1042
          %s1044 = sshll.u32 %s1032, 4
          %s1045 = int_to_ptr.vmem [resolvable:$true] %s1044
          %1050 = dma.vmem_to_hbm [thread:$0]  %s1045, 1024, %s1043, %s1029, 128, 256, 8
        $region68: #{tpu_custom_call.1} parent=39 // pred_fallthru
          _
      $region40: #{tpu_custom_call.1} parent=5 // pred_fallthru
        _
      %p1051 = scmp.le.s32.totalorder 2, %s20
      // Predicated region
      $region69: #{tpu_custom_call.1} parent=5 // pred_check
        %p1052 = pneg %p1051
      $region70: #{tpu_custom_call.1} parent=5 // pred_check_branch
        %1054 = sbr.rel (%p1052) target = $region72
      $region71: #{tpu_custom_call.1} parent=5 // pred_region
        %s1055 = ssub.s32 %s20, 2
        // Predicated region
        $region73: #{tpu_custom_call.1} parent=71 // pred_check
          %p1056 = pneg %p210
        $region74: #{tpu_custom_call.1} parent=71 // pred_check_branch
          %1058 = sbr.rel (%p1056) target = $region76
        $region75: #{tpu_custom_call.1} parent=71 // pred_region
          %s1059 = sand.u32 %s195, 1
          %s1060 = scalar_lea.sflag [#allocation6], %s1059
          %s1061 = sand.u32 %s195, 1
          %s1062 = smul.addr %s1061, 64
          %s1063 = scalar_lea.vmem [#allocation10], %s1062
          %1064 = dma.done %s1060, 1024
        $region76: #{tpu_custom_call.1} parent=71 // pred_fallthru
          _
      $region72: #{tpu_custom_call.1} parent=5 // pred_fallthru
        _
    $region6: #{tpu_custom_call.1} parent=1 // loop_footer
      %s24 = sadd.s32 1, %s20
    $region7: #{tpu_custom_call.1} parent=1 // loop_footer_branch
      %19 = sbr.rel target = $region3
    $region8: #{tpu_custom_call.1} parent=1 // loop_exit
      _
    %1065 = vsyncpa [#allocation5], 1
    %s1066 = scalar_lea.sflag [#allocation5], 1
    %1067 = vsyncpa %s1066, 1
    %1068 = vsyncpa [#allocation8], 1
    %s1069 = scalar_lea.sflag [#allocation8], 1
    %1070 = vsyncpa %s1069, 1
    %1071 = vsyncpa [#allocation6], 1
    %s1072 = scalar_lea.sflag [#allocation6], 1
    %1073 = vsyncpa %s1072, 1

</llo_original>
